<compile_context>
chip_gen: v6e
topology: v6e:2x2x1
jax: 0.10.0
libtpu: 0.0.40
codegen_flags: <defaults>
</compile_context>

<pallas_src>
import jax
import jax.numpy as jnp
from jax.experimental import pallas as pl
from jax.experimental.pallas import tpu as pltpu

_K_PAD = 128  # 120 features padded to one full lane tile
_H = 64       # hidden width


def _mlp_kernel(x_ref,
                w1_ref, b1_ref,
                w2_ref, b2_ref,
                w3_ref, b3_ref,
                w4_ref, b4_ref,
                o_ref):
    # fc1 + relu  (bf16 MXU matmul, f32 accumulate)
    h = jnp.dot(x_ref[...], w1_ref[...],
                preferred_element_type=jnp.float32) + b1_ref[...]
    h = jnp.maximum(h, 0.0)
    # fc2 + relu
    h = jnp.dot(h.astype(jnp.bfloat16), w2_ref[...],
                preferred_element_type=jnp.float32) + b2_ref[...]
    h = jnp.maximum(h, 0.0)
    # fc3 + relu
    h = jnp.dot(h.astype(jnp.bfloat16), w3_ref[...],
                preferred_element_type=jnp.float32) + b3_ref[...]
    h = jnp.maximum(h, 0.0)
    # fc4 (64 -> 1) on the VPU/XLU: broadcast-row multiply + lane reduce.
    logits = jnp.sum(h * w4_ref[...], axis=-1, keepdims=True) + b4_ref[...]
    sig = jax.nn.sigmoid(logits)
    # Lane-dense unmasked store: replicate across 128 lanes; wrapper slices col 0.
    o_ref[...] = jnp.broadcast_to(sig, o_ref.shape).astype(o_ref.dtype)


def _resident_spec(arr):
    """Whole-array block, same block every grid step (stays VMEM-resident)."""
    return pl.BlockSpec(arr.shape, lambda i: (0, 0))


def net_forward(x, params, tile_b=128):
    """Forward pass of Net as one Pallas TPU kernel.

    x: (B, 120) float32
    params: dict with w1..w4 stored as (in, out) f32 and b1..b4 as (1, out) f32
    tile_b: batch tile (multiple of 16); use 512-2048 for large batches.
    returns: (B, 1) float32 sigmoid output.
    """
    B, F = x.shape
    assert F == 120 and tile_b % 16 == 0
    n_tiles = pl.cdiv(B, tile_b)
    Bp = n_tiles * tile_b

    # Pad batch to a tile multiple and features to 128; cast matmul operands to bf16.
    xp = jnp.pad(x, ((0, Bp - B), (0, _K_PAD - F))).astype(jnp.bfloat16)
    w1 = jnp.pad(params["w1"], ((0, _K_PAD - F), (0, 0))).astype(jnp.bfloat16)
    w2 = params["w2"].astype(jnp.bfloat16)
    w3 = params["w3"].astype(jnp.bfloat16)
    w4_row = params["w4"].reshape(1, _H).astype(jnp.float32)   # (64,1) -> (1,64) row
    b1, b2, b3, b4 = params["b1"], params["b2"], params["b3"], params["b4"]

    args = (xp, w1, b1, w2, b2, w3, b3, w4_row, b4)

    in_specs = [pl.BlockSpec((tile_b, _K_PAD), lambda i: (i, 0))]  # x: tiled over batch
    in_specs += [_resident_spec(a) for a in args[1:]]              # weights/biases resident
    out_specs = pl.BlockSpec((tile_b, 128), lambda i: (i, 0))      # lane-dense output slab

    flops = 2 * Bp * (_K_PAD * _H + _H * _H + _H * _H + _H)
    bytes_accessed = (xp.size * 2 + w1.size * 2 + w2.size * 2 + w3.size * 2
                      + w4_row.size * 4
                      + (b1.size + b2.size + b3.size + b4.size) * 4
                      + Bp * 128 * 4)

    out = pl.pallas_call(
        _mlp_kernel,
        out_shape=jax.ShapeDtypeStruct((Bp, 128), jnp.float32),
        grid=(n_tiles,),
        in_specs=in_specs,
        out_specs=out_specs,
        compiler_params=pltpu.CompilerParams(
            dimension_semantics=("parallel",)),
        cost_estimate=pl.CostEstimate(
            flops=flops, transcendentals=Bp, bytes_accessed=bytes_accessed),
    )(*args)

    return out[:B, :1]


def init_params(key):
    """Deterministic params matching nn.Linear shapes.

    PyTorch Linear(in, out) has weight (out, in), bias (out,); we store the
    transposed weight (in, out) and bias as (1, out).
    """
    dims = [(120, _H), (_H, _H), (_H, _H), (_H, 1)]
    params = {}
    for i, (fan_in, fan_out) in enumerate(dims, start=1):
        kw, kb, key = jax.random.split(key, 3)
        bound = 1.0 / jnp.sqrt(jnp.float32(fan_in))
        params[f"w{i}"] = jax.random.uniform(
            kw, (fan_in, fan_out), jnp.float32, minval=-bound, maxval=bound)
        params[f"b{i}"] = jax.random.uniform(
            kb, (1, fan_out), jnp.float32, minval=-bound, maxval=bound)
    return params


def net_forward_ref(x, params):
    """Pure-JAX reference mirroring the kernel's numerics (bf16 matmuls, f32 acc)."""
    w1 = params["w1"].astype(jnp.bfloat16)
    w2 = params["w2"].astype(jnp.bfloat16)
    w3 = params["w3"].astype(jnp.bfloat16)
    h = jnp.dot(x.astype(jnp.bfloat16), w1,
                preferred_element_type=jnp.float32) + params["b1"]
    h = jax.nn.relu(h)
    h = jnp.dot(h.astype(jnp.bfloat16), w2,
                preferred_element_type=jnp.float32) + params["b2"]
    h = jax.nn.relu(h)
    h = jnp.dot(h.astype(jnp.bfloat16), w3,
                preferred_element_type=jnp.float32) + params["b3"]
    h = jax.nn.relu(h)
    logits = jnp.sum(h * params["w4"].reshape(1, _H), axis=-1,
                     keepdims=True) + params["b4"]
    return jax.nn.sigmoid(logits)


if __name__ == "__main__":
    key = jax.random.PRNGKey(0)
    pkey, xkey = jax.random.split(key)
    params = init_params(pkey)

    B = 256  # exercises a 2-step batch grid at tile_b=128
    x = jax.random.normal(xkey, (B, 120), jnp.float32)

    out = jax.block_until_ready(net_forward(x, params, tile_b=128))
    ref = jax.block_until_ready(net_forward_ref(x, params))

    assert out.shape == (B, 1)
    assert jnp.allclose(out, ref, atol=1e-3, rtol=1e-3), float(jnp.max(jnp.abs(out - ref)))

    print("KERNEL_OK")
</pallas_src>

<mosaic_0001>
module attributes {stable_mosaic.version = 11 : i64} {
  func.func @_mlp_kernel(%arg0: i32, %arg1: memref<128x128xbf16, #tpu.memory_space<vmem>>, %arg2: memref<128x64xbf16, #tpu.memory_space<vmem>>, %arg3: memref<1x64xf32, #tpu.memory_space<vmem>>, %arg4: memref<64x64xbf16, #tpu.memory_space<vmem>>, %arg5: memref<1x64xf32, #tpu.memory_space<vmem>>, %arg6: memref<64x64xbf16, #tpu.memory_space<vmem>>, %arg7: memref<1x64xf32, #tpu.memory_space<vmem>>, %arg8: memref<1x64xf32, #tpu.memory_space<vmem>>, %arg9: memref<1x1xf32, #tpu.memory_space<vmem>>, %arg10: memref<128x128xf32, #tpu.memory_space<vmem>>) attributes {dimension_semantics = [#tpu.dimension_semantics<parallel>], iteration_bounds = array<i64: 2>, scalar_prefetch = 0 : i64, scratch_operands = 0 : i64, tpu.core_type = #tpu.core_type<tc>, window_params = [{transform_indices = @transform_0, window_bounds = array<i64: 128, 128>}, {pipeline_mode = #tpu.pipeline_mode<synchronous>, transform_indices = @transform_1, window_bounds = array<i64: 128, 64>}, {pipeline_mode = #tpu.pipeline_mode<synchronous>, transform_indices = @transform_2, window_bounds = array<i64: 1, 64>}, {pipeline_mode = #tpu.pipeline_mode<synchronous>, transform_indices = @transform_3, window_bounds = array<i64: 64, 64>}, {pipeline_mode = #tpu.pipeline_mode<synchronous>, transform_indices = @transform_4, window_bounds = array<i64: 1, 64>}, {pipeline_mode = #tpu.pipeline_mode<synchronous>, transform_indices = @transform_5, window_bounds = array<i64: 64, 64>}, {pipeline_mode = #tpu.pipeline_mode<synchronous>, transform_indices = @transform_6, window_bounds = array<i64: 1, 64>}, {pipeline_mode = #tpu.pipeline_mode<synchronous>, transform_indices = @transform_7, window_bounds = array<i64: 1, 64>}, {pipeline_mode = #tpu.pipeline_mode<synchronous>, transform_indices = @transform_8, window_bounds = array<i64: 1, 1>}, {transform_indices = @transform_9, window_bounds = array<i64: 128, 128>}]} {
    %c0 = arith.constant 0 : index
    %c0_0 = arith.constant 0 : index
    %0 = vector.load %arg1[%c0, %c0_0] : memref<128x128xbf16, #tpu.memory_space<vmem>>, vector<128x128xbf16>
    %c0_1 = arith.constant 0 : index
    %c0_2 = arith.constant 0 : index
    %1 = vector.load %arg2[%c0_1, %c0_2] : memref<128x64xbf16, #tpu.memory_space<vmem>>, vector<128x64xbf16>
    %cst = arith.constant dense<0.000000e+00> : vector<128x64xf32>
    %2 = tpu.matmul %0, %1, %cst {dimension_numbers = #tpu.dot_dimension_numbers<[1], [0], [0], [1], [0, 0, 1, 1], [], []>} : vector<128x128xbf16>, vector<128x64xbf16>, vector<128x64xf32> -> vector<128x64xf32>
    %c0_3 = arith.constant 0 : index
    %c0_4 = arith.constant 0 : index
    %3 = vector.load %arg3[%c0_3, %c0_4] : memref<1x64xf32, #tpu.memory_space<vmem>>, vector<1x64xf32>
    %4 = vector.broadcast %3 : vector<1x64xf32> to vector<128x64xf32>
    %5 = arith.addf %2, %4 : vector<128x64xf32>
    %cst_5 = arith.constant 0.000000e+00 : f32
    %6 = vector.broadcast %cst_5 : f32 to vector<128x64xf32>
    %7 = arith.maximumf %5, %6 : vector<128x64xf32>
    %8 = arith.truncf %7 : vector<128x64xf32> to vector<128x64xbf16>
    %c0_6 = arith.constant 0 : index
    %c0_7 = arith.constant 0 : index
    %9 = vector.load %arg4[%c0_6, %c0_7] : memref<64x64xbf16, #tpu.memory_space<vmem>>, vector<64x64xbf16>
    %cst_8 = arith.constant dense<0.000000e+00> : vector<128x64xf32>
    %10 = tpu.matmul %8, %9, %cst_8 {dimension_numbers = #tpu.dot_dimension_numbers<[1], [0], [0], [1], [0, 0, 1, 1], [], []>} : vector<128x64xbf16>, vector<64x64xbf16>, vector<128x64xf32> -> vector<128x64xf32>
    %c0_9 = arith.constant 0 : index
    %c0_10 = arith.constant 0 : index
    %11 = vector.load %arg5[%c0_9, %c0_10] : memref<1x64xf32, #tpu.memory_space<vmem>>, vector<1x64xf32>
    %12 = vector.broadcast %11 : vector<1x64xf32> to vector<128x64xf32>
    %13 = arith.addf %10, %12 : vector<128x64xf32>
    %cst_11 = arith.constant 0.000000e+00 : f32
    %14 = vector.broadcast %cst_11 : f32 to vector<128x64xf32>
    %15 = arith.maximumf %13, %14 : vector<128x64xf32>
    %16 = arith.truncf %15 : vector<128x64xf32> to vector<128x64xbf16>
    %c0_12 = arith.constant 0 : index
    %c0_13 = arith.constant 0 : index
    %17 = vector.load %arg6[%c0_12, %c0_13] : memref<64x64xbf16, #tpu.memory_space<vmem>>, vector<64x64xbf16>
    %cst_14 = arith.constant dense<0.000000e+00> : vector<128x64xf32>
    %18 = tpu.matmul %16, %17, %cst_14 {dimension_numbers = #tpu.dot_dimension_numbers<[1], [0], [0], [1], [0, 0, 1, 1], [], []>} : vector<128x64xbf16>, vector<64x64xbf16>, vector<128x64xf32> -> vector<128x64xf32>
    %c0_15 = arith.constant 0 : index
    %c0_16 = arith.constant 0 : index
    %19 = vector.load %arg7[%c0_15, %c0_16] : memref<1x64xf32, #tpu.memory_space<vmem>>, vector<1x64xf32>
    %20 = vector.broadcast %19 : vector<1x64xf32> to vector<128x64xf32>
    %21 = arith.addf %18, %20 : vector<128x64xf32>
    %cst_17 = arith.constant 0.000000e+00 : f32
    %22 = vector.broadcast %cst_17 : f32 to vector<128x64xf32>
    %23 = arith.maximumf %21, %22 : vector<128x64xf32>
    %c0_18 = arith.constant 0 : index
    %c0_19 = arith.constant 0 : index
    %24 = vector.load %arg8[%c0_18, %c0_19] : memref<1x64xf32, #tpu.memory_space<vmem>>, vector<1x64xf32>
    %25 = vector.broadcast %24 : vector<1x64xf32> to vector<128x64xf32>
    %26 = arith.mulf %23, %25 : vector<128x64xf32>
    %cst_20 = arith.constant dense<0.000000e+00> : vector<128xf32>
    %27 = vector.multi_reduction <add>, %26, %cst_20 [1] : vector<128x64xf32> to vector<128xf32>
    %28 = vector.shape_cast %27 : vector<128xf32> to vector<128x1xf32>
    %c0_21 = arith.constant 0 : index
    %c0_22 = arith.constant 0 : index
    %29 = vector.load %arg9[%c0_21, %c0_22] : memref<1x1xf32, #tpu.memory_space<vmem>>, vector<1x1xf32>
    %30 = vector.broadcast %29 : vector<1x1xf32> to vector<128x1xf32>
    %31 = arith.addf %28, %30 : vector<128x1xf32>
    %32 = arith.negf %31 : vector<128x1xf32>
    %33 = math.exp %32 : vector<128x1xf32>
    %cst_23 = arith.constant 1.000000e+00 : f32
    %34 = vector.broadcast %cst_23 : f32 to vector<128x1xf32>
    %35 = arith.addf %34, %33 : vector<128x1xf32>
    %36 = arith.divf %34, %35 : vector<128x1xf32>
    %37 = vector.shape_cast %36 : vector<128x1xf32> to vector<128x1xf32>
    %38 = vector.broadcast %37 : vector<128x1xf32> to vector<128x128xf32>
    %c0_24 = arith.constant 0 : index
    %c0_25 = arith.constant 0 : index
    %39 = vector.load %arg10[%c0_24, %c0_25] : memref<128x128xf32, #tpu.memory_space<vmem>>, vector<128x128xf32>
    tpu.vector_store %arg10[%c0_24, %c0_25], %38 {strides = array<i32>} : memref<128x128xf32, #tpu.memory_space<vmem>>, vector<128x128xf32>,
    return
  }
  func.func @transform_0(%arg0: i32) -> (i32, i32) {
    %c0_i32 = arith.constant 0 : i32
    %c0_i32_0 = arith.constant 0 : i32
    return %arg0, %c0_i32 : i32, i32
  }
  func.func @transform_1(%arg0: i32) -> (i32, i32) {
    %c0_i32 = arith.constant 0 : i32
    %c0_i32_0 = arith.constant 0 : i32
    %c0_i32_1 = arith.constant 0 : i32
    return %c0_i32, %c0_i32_0 : i32, i32
  }
  func.func @transform_2(%arg0: i32) -> (i32, i32) {
    %c0_i32 = arith.constant 0 : i32
    %c0_i32_0 = arith.constant 0 : i32
    %c0_i32_1 = arith.constant 0 : i32
    return %c0_i32, %c0_i32_0 : i32, i32
  }
  func.func @transform_3(%arg0: i32) -> (i32, i32) {
    %c0_i32 = arith.constant 0 : i32
    %c0_i32_0 = arith.constant 0 : i32
    %c0_i32_1 = arith.constant 0 : i32
    return %c0_i32, %c0_i32_0 : i32, i32
  }
  func.func @transform_4(%arg0: i32) -> (i32, i32) {
    %c0_i32 = arith.constant 0 : i32
    %c0_i32_0 = arith.constant 0 : i32
    %c0_i32_1 = arith.constant 0 : i32
    return %c0_i32, %c0_i32_0 : i32, i32
  }
  func.func @transform_5(%arg0: i32) -> (i32, i32) {
    %c0_i32 = arith.constant 0 : i32
    %c0_i32_0 = arith.constant 0 : i32
    %c0_i32_1 = arith.constant 0 : i32
    return %c0_i32, %c0_i32_0 : i32, i32
  }
  func.func @transform_6(%arg0: i32) -> (i32, i32) {
    %c0_i32 = arith.constant 0 : i32
    %c0_i32_0 = arith.constant 0 : i32
    %c0_i32_1 = arith.constant 0 : i32
    return %c0_i32, %c0_i32_0 : i32, i32
  }
  func.func @transform_7(%arg0: i32) -> (i32, i32) {
    %c0_i32 = arith.constant 0 : i32
    %c0_i32_0 = arith.constant 0 : i32
    %c0_i32_1 = arith.constant 0 : i32
    return %c0_i32, %c0_i32_0 : i32, i32
  }
  func.func @transform_8(%arg0: i32) -> (i32, i32) {
    %c0_i32 = arith.constant 0 : i32
    %c0_i32_0 = arith.constant 0 : i32
    %c0_i32_1 = arith.constant 0 : i32
    return %c0_i32, %c0_i32_0 : i32, i32
  }
  func.func @transform_9(%arg0: i32) -> (i32, i32) {
    %c0_i32 = arith.constant 0 : i32
    %c0_i32_0 = arith.constant 0 : i32
    return %arg0, %c0_i32 : i32, i32
  }
}

</mosaic_0001>

<llo_original>
// kernel: tpu_custom_call.1
$region0: #{tpu_custom_call.1}
  #allocation0 [shape = 'u32[]', space=smem, size = 0x4, offset = 0x4, fixed_abs, tag = 'smem constant byte address 0x4 - core index']
  #allocation1 [shape = 'u32[144,128]{1,0:T(1,128)}', space=vmem, size = 0x12000, scoped, tag = 'internal scratch']
  #allocation2 [shape = 'f32[1,1]{1,0:T(1,128)S(1)}', space=vmem, size = 0x200, scoped, tag = 'scoped memory for tpu_custom_call.1']
  %s0 = inlined_call_operand.hbm [shape: bf16[256,128], index: 0, kind: input, shape index: {}]
  %s1 = inlined_call_operand.vmem [shape: bf16[128,64], index: 1, kind: input, shape index: {}]
  %s2 = inlined_call_operand.vmem [shape: f32[1,64], index: 2, kind: input, shape index: {}]
  %s3 = inlined_call_operand.vmem [shape: bf16[64,64], index: 3, kind: input, shape index: {}]
  %s4 = inlined_call_operand.vmem [shape: f32[1,64], index: 4, kind: input, shape index: {}]
  %s5 = inlined_call_operand.vmem [shape: bf16[64,64], index: 5, kind: input, shape index: {}]
  %s6 = inlined_call_operand.vmem [shape: f32[1,64], index: 6, kind: input, shape index: {}]
  %s7 = inlined_call_operand.vmem [shape: f32[1,64], index: 7, kind: input, shape index: {}]
  %s8 = inlined_call_operand.<no memory space> [shape: f32[1,1], index: 8, kind: input, shape index: {}]
  %s9 = inlined_call_operand.hbm [shape: f32[256,128], index: 9, kind: output, shape index: {}]
  %s10 = sld [smem:[#allocation0]]
  $region73: #{tpu_custom_call.1} parent=0
    _
  %s12 = ssub.s32 1, %s10
  %s13 = scalar_select 0, %s12, %s10
  %v14 = vstv %s8
  %15 = vst [vmem:[#allocation2] sm:$0x1] %v14
  $region1: #{tpu_custom_call.1} parent=0
    #allocation3 [shape = 'u8[65536]{0}', space=vmem, size = 0x10000, scoped, tag = 'input window, operand 0']
    #allocation4 [shape = 's32[2]{0}', space=sflag, size = 0x8, scoped, tag = 'scoped memory for tpu_custom_call.1']
    #allocation5 [shape = 's32[2]{0}', space=sflag, size = 0x8, scoped, tag = 'scoped memory for tpu_custom_call.1']
    #allocation6 [shape = 'u8[131072]{0}', space=vmem, size = 0x20000, scoped, tag = 'output window, operand 0']
    %16 = vsyncpa [#allocation4], 0
    %s17 = scalar_lea.sflag [#allocation4], 1
    %18 = vsyncpa %s17, 0
    %19 = vsyncpa [#allocation5], 0
    %s20 = scalar_lea.sflag [#allocation5], 1
    %21 = vsyncpa %s20, 0
    loop: start=0, step=1, limit=4
    $region2: #{tpu_custom_call.1} parent=1 // loop_pre_header
      _
    $region3: #{tpu_custom_call.1} parent=1 // loop_header
      %s23 = sphi 0, %s27
      %p24 = scmp.ge.s32.totalorder %s23, 4
      %s33 = sphi 0, %s35
      %s36 = sphi 0, %s33
      %s37 = sphi 0, %s36
      %s53 = sphi 0, %s37
      %s57 = sphi 0, %s57
      %s59 = sphi 0, %s57
      %s60 = sphi 0, %s59
      %s74 = sphi 0, %s60
      %s78 = sphi 0, %s78
      %s80 = sphi 0, %s78
      %s81 = sphi 0, %s80
      %s95 = sphi 0, %s81
      %s99 = sphi 0, %s99
      %s101 = sphi 0, %s99
      %s102 = sphi 0, %s101
      %s116 = sphi 0, %s102
      %s120 = sphi 0, %s120
      %s122 = sphi 0, %s120
      %s123 = sphi 0, %s122
      %s137 = sphi 0, %s123
      %s141 = sphi 0, %s141
      %s143 = sphi 0, %s141
      %s144 = sphi 0, %s143
      %s158 = sphi 0, %s144
      %s162 = sphi 0, %s162
      %s164 = sphi 0, %s162
      %s165 = sphi 0, %s164
      %s179 = sphi 0, %s165
      %s183 = sphi 0, %s183
      %s185 = sphi 0, %s183
      %s186 = sphi 0, %s185
      %s200 = sphi 0, %s186
      %s204 = sphi 0, %s204
      %s206 = sphi 0, %s204
      %s207 = sphi 0, %s206
      %s221 = sphi 0, %s207
      %s227 = sphi 0, %s229
      %s230 = sphi 0, %s227
      %s231 = sphi 0, %s230
      %s247 = sphi 0, %s231
    $region4: #{tpu_custom_call.1} parent=1 // loop_header_branch
      %26 = sbr.rel (%p24) target = $region8
    $region5: #{tpu_custom_call.1} parent=1 // loop_body
      %s28 = ssub.s32 %s23, 1
      %s29 = ssub.s32 %s23, 2
      %s30 = sadd.s32 %s23, 1
      %s31 = ssub.s32 %s23, %s30
      %p32 = scmp.eq.s32.totalorder %s31, 0
      %s34 = sadd.s32 %s33, 1
      %s35 = scalar_select %p32, %s33, %s34
      %p38 = pneg %p32
      %p39 = scmp.eq.s32.totalorder %s23, 1
      %p40 = por %p38, %p39
      %p41 = scmp.ne.s32.totalorder %s33, %s36
      %p42 = scmp.eq.s32.totalorder %s23, 0
      %p43 = por %p41, %p42
      %p44 = scmp.ne.s32.totalorder %s33, %s36
      %p45 = scmp.eq.s32.totalorder %s28, 1
      %p46 = por %p44, %p45
      %p47 = scmp.ne.s32.totalorder %s36, %s37
      %p48 = scmp.eq.s32.totalorder %s28, 0
      %p49 = por %p47, %p48
      %p50 = scmp.ne.s32.totalorder %s36, %s37
      %p51 = scmp.eq.s32.totalorder %s29, 1
      %p52 = por %p50, %p51
      %p54 = scmp.ne.s32.totalorder %s37, %s53
      %p55 = scmp.eq.s32.totalorder %s29, 0
      %p56 = por %p54, %p55
      %s58 = sadd.s32 %s57, 1
      %p61 = scmp.eq.s32.totalorder %s23, 1
      %p62 = scmp.ne.s32.totalorder %s57, %s59
      %p63 = scmp.eq.s32.totalorder %s23, 0
      %p64 = por %p62, %p63
      %p65 = scmp.ne.s32.totalorder %s57, %s59
      %p66 = scmp.eq.s32.totalorder %s28, 1
      %p67 = por %p65, %p66
      %p68 = scmp.ne.s32.totalorder %s59, %s60
      %p69 = scmp.eq.s32.totalorder %s28, 0
      %p70 = por %p68, %p69
      %p71 = scmp.ne.s32.totalorder %s59, %s60
      %p72 = scmp.eq.s32.totalorder %s29, 1
      %p73 = por %p71, %p72
      %p75 = scmp.ne.s32.totalorder %s60, %s74
      %p76 = scmp.eq.s32.totalorder %s29, 0
      %p77 = por %p75, %p76
      %s79 = sadd.s32 %s78, 1
      %p82 = scmp.eq.s32.totalorder %s23, 1
      %p83 = scmp.ne.s32.totalorder %s78, %s80
      %p84 = scmp.eq.s32.totalorder %s23, 0
      %p85 = por %p83, %p84
      %p86 = scmp.ne.s32.totalorder %s78, %s80
      %p87 = scmp.eq.s32.totalorder %s28, 1
      %p88 = por %p86, %p87
      %p89 = scmp.ne.s32.totalorder %s80, %s81
      %p90 = scmp.eq.s32.totalorder %s28, 0
      %p91 = por %p89, %p90
      %p92 = scmp.ne.s32.totalorder %s80, %s81
      %p93 = scmp.eq.s32.totalorder %s29, 1
      %p94 = por %p92, %p93
      %p96 = scmp.ne.s32.totalorder %s81, %s95
      %p97 = scmp.eq.s32.totalorder %s29, 0
      %p98 = por %p96, %p97
      %s100 = sadd.s32 %s99, 1
      %p103 = scmp.eq.s32.totalorder %s23, 1
      %p104 = scmp.ne.s32.totalorder %s99, %s101
      %p105 = scmp.eq.s32.totalorder %s23, 0
      %p106 = por %p104, %p105
      %p107 = scmp.ne.s32.totalorder %s99, %s101
      %p108 = scmp.eq.s32.totalorder %s28, 1
      %p109 = por %p107, %p108
      %p110 = scmp.ne.s32.totalorder %s101, %s102
      %p111 = scmp.eq.s32.totalorder %s28, 0
      %p112 = por %p110, %p111
      %p113 = scmp.ne.s32.totalorder %s101, %s102
      %p114 = scmp.eq.s32.totalorder %s29, 1
      %p115 = por %p113, %p114
      %p117 = scmp.ne.s32.totalorder %s102, %s116
      %p118 = scmp.eq.s32.totalorder %s29, 0
      %p119 = por %p117, %p118
      %s121 = sadd.s32 %s120, 1
      %p124 = scmp.eq.s32.totalorder %s23, 1
      %p125 = scmp.ne.s32.totalorder %s120, %s122
      %p126 = scmp.eq.s32.totalorder %s23, 0
      %p127 = por %p125, %p126
      %p128 = scmp.ne.s32.totalorder %s120, %s122
      %p129 = scmp.eq.s32.totalorder %s28, 1
      %p130 = por %p128, %p129
      %p131 = scmp.ne.s32.totalorder %s122, %s123
      %p132 = scmp.eq.s32.totalorder %s28, 0
      %p133 = por %p131, %p132
      %p134 = scmp.ne.s32.totalorder %s122, %s123
      %p135 = scmp.eq.s32.totalorder %s29, 1
      %p136 = por %p134, %p135
      %p138 = scmp.ne.s32.totalorder %s123, %s137
      %p139 = scmp.eq.s32.totalorder %s29, 0
      %p140 = por %p138, %p139
      %s142 = sadd.s32 %s141, 1
      %p145 = scmp.eq.s32.totalorder %s23, 1
      %p146 = scmp.ne.s32.totalorder %s141, %s143
      %p147 = scmp.eq.s32.totalorder %s23, 0
      %p148 = por %p146, %p147
      %p149 = scmp.ne.s32.totalorder %s141, %s143
      %p150 = scmp.eq.s32.totalorder %s28, 1
      %p151 = por %p149, %p150
      %p152 = scmp.ne.s32.totalorder %s143, %s144
      %p153 = scmp.eq.s32.totalorder %s28, 0
      %p154 = por %p152, %p153
      %p155 = scmp.ne.s32.totalorder %s143, %s144
      %p156 = scmp.eq.s32.totalorder %s29, 1
      %p157 = por %p155, %p156
      %p159 = scmp.ne.s32.totalorder %s144, %s158
      %p160 = scmp.eq.s32.totalorder %s29, 0
      %p161 = por %p159, %p160
      %s163 = sadd.s32 %s162, 1
      %p166 = scmp.eq.s32.totalorder %s23, 1
      %p167 = scmp.ne.s32.totalorder %s162, %s164
      %p168 = scmp.eq.s32.totalorder %s23, 0
      %p169 = por %p167, %p168
      %p170 = scmp.ne.s32.totalorder %s162, %s164
      %p171 = scmp.eq.s32.totalorder %s28, 1
      %p172 = por %p170, %p171
      %p173 = scmp.ne.s32.totalorder %s164, %s165
      %p174 = scmp.eq.s32.totalorder %s28, 0
      %p175 = por %p173, %p174
      %p176 = scmp.ne.s32.totalorder %s164, %s165
      %p177 = scmp.eq.s32.totalorder %s29, 1
      %p178 = por %p176, %p177
      %p180 = scmp.ne.s32.totalorder %s165, %s179
      %p181 = scmp.eq.s32.totalorder %s29, 0
      %p182 = por %p180, %p181
      %s184 = sadd.s32 %s183, 1
      %p187 = scmp.eq.s32.totalorder %s23, 1
      %p188 = scmp.ne.s32.totalorder %s183, %s185
      %p189 = scmp.eq.s32.totalorder %s23, 0
      %p190 = por %p188, %p189
      %p191 = scmp.ne.s32.totalorder %s183, %s185
      %p192 = scmp.eq.s32.totalorder %s28, 1
      %p193 = por %p191, %p192
      %p194 = scmp.ne.s32.totalorder %s185, %s186
      %p195 = scmp.eq.s32.totalorder %s28, 0
      %p196 = por %p194, %p195
      %p197 = scmp.ne.s32.totalorder %s185, %s186
      %p198 = scmp.eq.s32.totalorder %s29, 1
      %p199 = por %p197, %p198
      %p201 = scmp.ne.s32.totalorder %s186, %s200
      %p202 = scmp.eq.s32.totalorder %s29, 0
      %p203 = por %p201, %p202
      %s205 = sadd.s32 %s204, 1
      %p208 = scmp.eq.s32.totalorder %s23, 1
      %p209 = scmp.ne.s32.totalorder %s204, %s206
      %p210 = scmp.eq.s32.totalorder %s23, 0
      %p211 = por %p209, %p210
      %p212 = scmp.ne.s32.totalorder %s204, %s206
      %p213 = scmp.eq.s32.totalorder %s28, 1
      %p214 = por %p212, %p213
      %p215 = scmp.ne.s32.totalorder %s206, %s207
      %p216 = scmp.eq.s32.totalorder %s28, 0
      %p217 = por %p215, %p216
      %p218 = scmp.ne.s32.totalorder %s206, %s207
      %p219 = scmp.eq.s32.totalorder %s29, 1
      %p220 = por %p218, %p219
      %p222 = scmp.ne.s32.totalorder %s207, %s221
      %p223 = scmp.eq.s32.totalorder %s29, 0
      %p224 = por %p222, %p223
      %s225 = ssub.s32 %s23, %s30
      %p226 = scmp.eq.s32.totalorder %s225, 0
      %s228 = sadd.s32 %s227, 1
      %s229 = scalar_select %p226, %s227, %s228
      %p232 = pneg %p226
      %p233 = scmp.eq.s32.totalorder %s23, 1
      %p234 = por %p232, %p233
      %p235 = scmp.ne.s32.totalorder %s227, %s230
      %p236 = scmp.eq.s32.totalorder %s23, 0
      %p237 = por %p235, %p236
      %p238 = scmp.ne.s32.totalorder %s227, %s230
      %p239 = scmp.eq.s32.totalorder %s28, 1
      %p240 = por %p238, %p239
      %p241 = scmp.ne.s32.totalorder %s230, %s231
      %p242 = scmp.eq.s32.totalorder %s28, 0
      %p243 = por %p241, %p242
      %p244 = scmp.ne.s32.totalorder %s230, %s231
      %p245 = scmp.eq.s32.totalorder %s29, 1
      %p246 = por %p244, %p245
      %p248 = scmp.ne.s32.totalorder %s231, %s247
      %p249 = scmp.eq.s32.totalorder %s29, 0
      %p250 = por %p248, %p249
      %p251 = scmp.le.s32.totalorder 1, %s23
      %p252 = scmp.lt.s32.totalorder %s23, 3
      %p253 = pnand %p251, %p252
      %p254 = pneg %p253
      // Predicated region
      $region9: #{tpu_custom_call.1} parent=5 // pred_check
        _
      $region10: #{tpu_custom_call.1} parent=5 // pred_check_branch
        %256 = sbr.rel (%p253) target = $region12
      $region11: #{tpu_custom_call.1} parent=5 // pred_region
        %s257 = ssub.s32 %s23, 1
        // Predicated region
        $region13: #{tpu_custom_call.1} parent=11 // pred_check
          %p258 = pneg %p70
        $region14: #{tpu_custom_call.1} parent=11 // pred_check_branch
          %260 = sbr.rel (%p258) target = $region16
        $region15: #{tpu_custom_call.1} parent=11 // pred_region
          _
        $region16: #{tpu_custom_call.1} parent=11 // pred_fallthru
          _
        // Predicated region
        $region17: #{tpu_custom_call.1} parent=11 // pred_check
          %p261 = pneg %p91
        $region18: #{tpu_custom_call.1} parent=11 // pred_check_branch
          %263 = sbr.rel (%p261) target = $region20
        $region19: #{tpu_custom_call.1} parent=11 // pred_region
          _
        $region20: #{tpu_custom_call.1} parent=11 // pred_fallthru
          _
        // Predicated region
        $region21: #{tpu_custom_call.1} parent=11 // pred_check
          %p264 = pneg %p112
        $region22: #{tpu_custom_call.1} parent=11 // pred_check_branch
          %266 = sbr.rel (%p264) target = $region24
        $region23: #{tpu_custom_call.1} parent=11 // pred_region
          _
        $region24: #{tpu_custom_call.1} parent=11 // pred_fallthru
          _
        // Predicated region
        $region25: #{tpu_custom_call.1} parent=11 // pred_check
          %p267 = pneg %p133
        $region26: #{tpu_custom_call.1} parent=11 // pred_check_branch
          %269 = sbr.rel (%p267) target = $region28
        $region27: #{tpu_custom_call.1} parent=11 // pred_region
          _
        $region28: #{tpu_custom_call.1} parent=11 // pred_fallthru
          _
        // Predicated region
        $region29: #{tpu_custom_call.1} parent=11 // pred_check
          %p270 = pneg %p154
        $region30: #{tpu_custom_call.1} parent=11 // pred_check_branch
          %272 = sbr.rel (%p270) target = $region32
        $region31: #{tpu_custom_call.1} parent=11 // pred_region
          _
        $region32: #{tpu_custom_call.1} parent=11 // pred_fallthru
          _
        // Predicated region
        $region33: #{tpu_custom_call.1} parent=11 // pred_check
          %p273 = pneg %p175
        $region34: #{tpu_custom_call.1} parent=11 // pred_check_branch
          %275 = sbr.rel (%p273) target = $region36
        $region35: #{tpu_custom_call.1} parent=11 // pred_region
          _
        $region36: #{tpu_custom_call.1} parent=11 // pred_fallthru
          _
        // Predicated region
        $region37: #{tpu_custom_call.1} parent=11 // pred_check
          %p276 = pneg %p196
        $region38: #{tpu_custom_call.1} parent=11 // pred_check_branch
          %278 = sbr.rel (%p276) target = $region40
        $region39: #{tpu_custom_call.1} parent=11 // pred_region
          _
        $region40: #{tpu_custom_call.1} parent=11 // pred_fallthru
          _
        // Predicated region
        $region41: #{tpu_custom_call.1} parent=11 // pred_check
          %p279 = pneg %p217
        $region42: #{tpu_custom_call.1} parent=11 // pred_check_branch
          %281 = sbr.rel (%p279) target = $region44
        $region43: #{tpu_custom_call.1} parent=11 // pred_region
          _
        $region44: #{tpu_custom_call.1} parent=11 // pred_fallthru
          _
      $region12: #{tpu_custom_call.1} parent=5 // pred_fallthru
        _
      %p282 = scmp.lt.s32.totalorder %s23, 2
      // Predicated region
      $region45: #{tpu_custom_call.1} parent=5 // pred_check
        %p283 = pneg %p282
      $region46: #{tpu_custom_call.1} parent=5 // pred_check_branch
        %285 = sbr.rel (%p283) target = $region48
      $region47: #{tpu_custom_call.1} parent=5 // pred_region
        // Predicated region
        $region49: #{tpu_custom_call.1} parent=47 // pred_check
          %p286 = pneg %p43
        $region50: #{tpu_custom_call.1} parent=47 // pred_check_branch
          %288 = sbr.rel (%p286) target = $region52
        $region51: #{tpu_custom_call.1} parent=47 // pred_region
          %s289 = sand.u32 %s33, 1
          %s290 = scalar_lea.sflag [#allocation4], %s289
          %s291 = sand.u32 %s33, 1
          %s292 = smul.addr %s291, 64
          %s293 = scalar_lea.vmem [#allocation3], %s292
          %s294 = smul.u32 16, %s23
          %s296 = ssub.s32 1024, 1024
          %297 = vsyncadd %s290, %s296
          %s298 = smul.addr %s294, 64
          %s299 = scalar_lea.hbm %s0, %s298
          %s300 = sshll.u32 %s293, 4
          %s301 = int_to_ptr.vmem [resolvable:$true] %s300
          %306 = dma.hbm_to_vmem [thread:$0]  %s299, 1024, %s301, %s290, 64, 64, 4
        $region52: #{tpu_custom_call.1} parent=47 // pred_fallthru
          _
      $region48: #{tpu_custom_call.1} parent=5 // pred_fallthru
        _
      %p307 = scmp.le.s32.totalorder 1, %s23
      %p308 = scmp.lt.s32.totalorder %s23, 3
      %p309 = pnand %p307, %p308
      %p310 = pneg %p309
      // Predicated region
      $region53: #{tpu_custom_call.1} parent=5 // pred_check
        _
      $region54: #{tpu_custom_call.1} parent=5 // pred_check_branch
        %312 = sbr.rel (%p309) target = $region56
      $region55: #{tpu_custom_call.1} parent=5 // pred_region
        %s313 = ssub.s32 %s23, 1
        %s314 = sand.u32 %s36, 1
        %s315 = scalar_lea.sflag [#allocation4], %s314
        %s316 = sand.u32 %s36, 1
        %s317 = smul.addr %s316, 64
        %s318 = scalar_lea.vmem [#allocation3], %s317
        // Predicated region
        $region57: #{tpu_custom_call.1} parent=55 // pred_check
          %p319 = pneg %p49
        $region58: #{tpu_custom_call.1} parent=55 // pred_check_branch
          %321 = sbr.rel (%p319) target = $region60
        $region59: #{tpu_custom_call.1} parent=55 // pred_region
          %322 = dma.done %s315, 1024
        $region60: #{tpu_custom_call.1} parent=55 // pred_fallthru
          _
        %s323 = sand.u32 %s36, 1
        %s324 = scalar_lea.sflag [#allocation4], %s323
        %s325 = sand.u32 %s36, 1
        %s326 = smul.addr %s325, 64
        %s327 = scalar_lea.vmem [#allocation3], %s326
        %p328 = pneg %p49
        %p329 = pneg %p46
        %p330 = pneg %p70
        %p331 = pneg %p67
        %p332 = pneg %p91
        %p333 = pneg %p88
        %p334 = pneg %p112
        %p335 = pneg %p109
        %p336 = pneg %p133
        %p337 = pneg %p130
        %p338 = pneg %p154
        %p339 = pneg %p151
        %p340 = pneg %p175
        %p341 = pneg %p172
        %p342 = pneg %p196
        %p343 = pneg %p193
        %p344 = pneg %p217
        %p345 = pneg %p214
        %p346 = pneg %p243
        %p347 = pneg %p240
        %s348 = sand.u32 %s230, 1
        %s349 = scalar_lea.sflag [#allocation5], %s348
        %s350 = sand.u32 %s230, 1
        %s351 = smul.addr %s350, 128
        %s352 = scalar_lea.vmem [#allocation6], %s351
        %s353 = smul.u32 16, %s28
        %s354 = smul.u32 16, %s28
        %v356 = vld [vmem:[%s318] sm:$0xf]
        %v357 = vld [vmem:[%s318 + $0x4] sm:$0xf]
        %v358 = vld [vmem:[%s318 + $0x8] sm:$0xf]
        %v359 = vld [vmem:[%s318 + $0xc] sm:$0xf]
        %v360 = vld [vmem:[%s318 + $0x10] sm:$0xf]
        %v361 = vld [vmem:[%s318 + $0x14] sm:$0xf]
        %v362 = vld [vmem:[%s318 + $0x18] sm:$0xf]
        %v363 = vld [vmem:[%s318 + $0x1c] sm:$0xf]
        %v364 = vld [vmem:[%s318 + $0x20] sm:$0xf]
        %v365 = vld [vmem:[%s318 + $0x24] sm:$0xf]
        %v366 = vld [vmem:[%s318 + $0x28] sm:$0xf]
        %v367 = vld [vmem:[%s318 + $0x2c] sm:$0xf]
        %v368 = vld [vmem:[%s318 + $0x30] sm:$0xf]
        %v369 = vld [vmem:[%s318 + $0x34] sm:$0xf]
        %v370 = vld [vmem:[%s318 + $0x38] sm:$0xf]
        %v371 = vld [vmem:[%s318 + $0x3c] sm:$0xf]
        %v372 = vld [vmem:[%s1] sm:$0xf]
        %v373 = vld [vmem:[%s1 + $0x4] sm:$0xf]
        %v374 = vld [vmem:[%s1 + $0x8] sm:$0xf]
        %v375 = vld [vmem:[%s1 + $0xc] sm:$0xf]
        %v376 = vld [vmem:[%s1 + $0x10] sm:$0xf]
        %v377 = vld [vmem:[%s1 + $0x14] sm:$0xf]
        %v378 = vld [vmem:[%s1 + $0x18] sm:$0xf]
        %v379 = vld [vmem:[%s1 + $0x1c] sm:$0xf]
        %v380 = vld [vmem:[%s1 + $0x20] sm:$0xf]
        %v381 = vld [vmem:[%s1 + $0x24] sm:$0xf]
        %v382 = vld [vmem:[%s1 + $0x28] sm:$0xf]
        %v383 = vld [vmem:[%s1 + $0x2c] sm:$0xf]
        %v384 = vld [vmem:[%s1 + $0x30] sm:$0xf]
        %v385 = vld [vmem:[%s1 + $0x34] sm:$0xf]
        %v386 = vld [vmem:[%s1 + $0x38] sm:$0xf]
        %v387 = vld [vmem:[%s1 + $0x3c] sm:$0xf]
        %v388 = vld [vmem:[%s2] sm:$0x1]
        %v390 = vlaneseq
        %v391 = vshrl.u32 %v390, 7
        %v392 = vsub.s32 0, %v391
        %v393 = vrot.slane %v388, %v392
        %v411 = vunpack.c.l.b16 %v356
        %v412 = vunpack.c.l.b16 %v357
        %v413 = vunpack.c.l.b16 %v358
        %v414 = vunpack.c.l.b16 %v359
        %v415 = vunpack.c.l.b16 %v360
        %v416 = vunpack.c.l.b16 %v361
        %v417 = vunpack.c.l.b16 %v362
        %v418 = vunpack.c.l.b16 %v363
        %v419 = vunpack.c.l.b16 %v364
        %v420 = vunpack.c.l.b16 %v365
        %v421 = vunpack.c.l.b16 %v366
        %v422 = vunpack.c.l.b16 %v367
        %v423 = vunpack.c.l.b16 %v368
        %v424 = vunpack.c.l.b16 %v369
        %v425 = vunpack.c.l.b16 %v370
        %v426 = vunpack.c.l.b16 %v371
        %v427 = vpack.c.b16 %v412, %v411
        %v428 = vpack.c.b16 %v414, %v413
        %v429 = vpack.c.b16 %v416, %v415
        %v430 = vpack.c.b16 %v418, %v417
        %v431 = vpack.c.b16 %v420, %v419
        %v432 = vpack.c.b16 %v422, %v421
        %v433 = vpack.c.b16 %v424, %v423
        %v434 = vpack.c.b16 %v426, %v425
        %v459 = vunpack.c.l.b16 %v372
        %v460 = vunpack.c.l.b16 %v373
        %v461 = vunpack.c.l.b16 %v374
        %v462 = vunpack.c.l.b16 %v375
        %v463 = vunpack.c.l.b16 %v376
        %v464 = vunpack.c.l.b16 %v377
        %v465 = vunpack.c.l.b16 %v378
        %v466 = vunpack.c.l.b16 %v379
        %v467 = vunpack.c.l.b16 %v380
        %v468 = vunpack.c.l.b16 %v381
        %v469 = vunpack.c.l.b16 %v382
        %v470 = vunpack.c.l.b16 %v383
        %v471 = vunpack.c.l.b16 %v384
        %v472 = vunpack.c.l.b16 %v385
        %v473 = vunpack.c.l.b16 %v386
        %v474 = vunpack.c.l.b16 %v387
        %v475 = vpack.c.b16 %v460, %v459
        %v476 = vpack.c.b16 %v462, %v461
        %v477 = vpack.c.b16 %v464, %v463
        %v478 = vpack.c.b16 %v466, %v465
        %v479 = vpack.c.b16 %v468, %v467
        %v480 = vpack.c.b16 %v470, %v469
        %v481 = vpack.c.b16 %v472, %v471
        %v482 = vpack.c.b16 %v474, %v473
        %491 = vmatprep.subr.bf16.mxu0 0
        %492 = vmatpush1.bf16.msra.mxu0 %v482
        %493 = vmatprep.subr.bf16.mxu0 0
        %494 = vmatpush1.bf16.msra.mxu0 %v481
        %495 = vmatprep.subr.bf16.mxu0 0
        %496 = vmatpush1.bf16.msra.mxu0 %v480
        %497 = vmatprep.subr.bf16.mxu0 0
        %498 = vmatpush1.bf16.msra.mxu0 %v479
        %499 = vmatprep.subr.bf16.mxu0 0
        %500 = vmatpush1.bf16.msra.mxu0 %v478
        %501 = vmatprep.subr.bf16.mxu0 0
        %502 = vmatpush1.bf16.msra.mxu0 %v477
        %503 = vmatprep.subr.bf16.mxu0 0
        %504 = vmatpush1.bf16.msra.mxu0 %v476
        %505 = vmatprep.subr.bf16.mxu0 0
        %506 = vmatpush1.bf16.msra.mxu0 %v475
        %507 = vmatprep.subr.bf16.mxu0 0
        %508 = vmatpush2.bf16.msra.mxu0 0
        %509 = vmatprep.subr.bf16.mxu0 0
        %510 = vmatpush2.bf16.msra.mxu0 0
        %511 = vmatprep.subr.bf16.mxu0 0
        %512 = vmatpush2.bf16.msra.mxu0 0
        %513 = vmatprep.subr.bf16.mxu0 0
        %514 = vmatpush2.bf16.msra.mxu0 0
        %515 = vmatprep.subr.bf16.mxu0 0
        %516 = vmatpush2.bf16.msra.mxu0 0
        %517 = vmatprep.subr.bf16.mxu0 0
        %518 = vmatpush2.bf16.msra.mxu0 0
        %519 = vmatprep.subr.bf16.mxu0 0
        %520 = vmatpush2.bf16.msra.mxu0 0
        %521 = vmatprep.subr.bf16.mxu0 0
        %522 = vmatpush2.bf16.msra.mxu0 0
        %523 = vmatprep.mubr.bf16.mxu0 0
        %524 = vmatmul.mubr.bf16.gmra.mxu0 %v427
        %v525 = vpop.f32.mrf.mxu0
        %v526 = vadd.f32 %v393, %v525
        %v527 = vpop.f32.mrf.mxu0
        %v528 = vpop.f32.mrf.mxu0
        %v529 = vadd.f32 %v393, %v528
        %v530 = vpop.f32.mrf.mxu0
        %531 = vmatprep.mubr.bf16.mxu0 0
        %532 = vmatmul.mubr.bf16.gmra.mxu0 %v428
        %v533 = vpop.f32.mrf.mxu0
        %v534 = vadd.f32 %v393, %v533
        %v535 = vpop.f32.mrf.mxu0
        %v536 = vpop.f32.mrf.mxu0
        %v537 = vadd.f32 %v393, %v536
        %v538 = vpop.f32.mrf.mxu0
        %539 = vmatprep.mubr.bf16.mxu0 0
        %540 = vmatmul.mubr.bf16.gmra.mxu0 %v429
        %v541 = vpop.f32.mrf.mxu0
        %v542 = vadd.f32 %v393, %v541
        %v543 = vpop.f32.mrf.mxu0
        %v544 = vpop.f32.mrf.mxu0
        %v545 = vadd.f32 %v393, %v544
        %v546 = vpop.f32.mrf.mxu0
        %547 = vmatprep.mubr.bf16.mxu0 0
        %548 = vmatmul.mubr.bf16.gmra.mxu0 %v430
        %v549 = vpop.f32.mrf.mxu0
        %v550 = vadd.f32 %v393, %v549
        %v551 = vpop.f32.mrf.mxu0
        %v552 = vpop.f32.mrf.mxu0
        %v553 = vadd.f32 %v393, %v552
        %v554 = vpop.f32.mrf.mxu0
        %555 = vmatprep.mubr.bf16.mxu0 0
        %556 = vmatmul.mubr.bf16.gmra.mxu0 %v431
        %v557 = vpop.f32.mrf.mxu0
        %v558 = vadd.f32 %v393, %v557
        %v559 = vpop.f32.mrf.mxu0
        %v560 = vpop.f32.mrf.mxu0
        %v561 = vadd.f32 %v393, %v560
        %v562 = vpop.f32.mrf.mxu0
        %563 = vmatprep.mubr.bf16.mxu0 0
        %564 = vmatmul.mubr.bf16.gmra.mxu0 %v432
        %v565 = vpop.f32.mrf.mxu0
        %v566 = vadd.f32 %v393, %v565
        %v567 = vpop.f32.mrf.mxu0
        %v568 = vpop.f32.mrf.mxu0
        %v569 = vadd.f32 %v393, %v568
        %v570 = vpop.f32.mrf.mxu0
        %571 = vmatprep.mubr.bf16.mxu0 0
        %572 = vmatmul.mubr.bf16.gmra.mxu0 %v433
        %v573 = vpop.f32.mrf.mxu0
        %v574 = vadd.f32 %v393, %v573
        %v575 = vpop.f32.mrf.mxu0
        %v576 = vpop.f32.mrf.mxu0
        %v577 = vadd.f32 %v393, %v576
        %v578 = vpop.f32.mrf.mxu0
        %579 = vmatprep.mubr.bf16.mxu0 0
        %580 = vmatmul.mubr.bf16.gmra.mxu0 %v434
        %v581 = vpop.f32.mrf.mxu0
        %v582 = vadd.f32 %v393, %v581
        %v583 = vpop.f32.mrf.mxu0
        %v584 = vpop.f32.mrf.mxu0
        %v585 = vadd.f32 %v393, %v584
        %v586 = vpop.f32.mrf.mxu0
        %587 = vdwg.mxu0
        %v588 = vmax.f32 %v526, 0.0
        %v589 = vmax.f32 %v529, 0.0
        %v590 = vmax.f32 %v534, 0.0
        %v591 = vmax.f32 %v537, 0.0
        %v592 = vmax.f32 %v542, 0.0
        %v593 = vmax.f32 %v545, 0.0
        %v594 = vmax.f32 %v550, 0.0
        %v595 = vmax.f32 %v553, 0.0
        %v596 = vmax.f32 %v558, 0.0
        %v597 = vmax.f32 %v561, 0.0
        %v598 = vmax.f32 %v566, 0.0
        %v599 = vmax.f32 %v569, 0.0
        %v600 = vmax.f32 %v574, 0.0
        %v601 = vmax.f32 %v577, 0.0
        %v602 = vmax.f32 %v582, 0.0
        %v603 = vmax.f32 %v585, 0.0
        %v604 = vpack.c.bf16 %v589, %v588
        %v605 = vpack.c.bf16 %v591, %v590
        %v606 = vpack.c.bf16 %v593, %v592
        %v607 = vpack.c.bf16 %v595, %v594
        %v608 = vpack.c.bf16 %v597, %v596
        %v609 = vpack.c.bf16 %v599, %v598
        %v610 = vpack.c.bf16 %v601, %v600
        %v611 = vpack.c.bf16 %v603, %v602
        %v612 = vld [vmem:[%s3] sm:$0xf]
        %v613 = vld [vmem:[%s3 + $0x4] sm:$0xf]
        %v614 = vld [vmem:[%s3 + $0x8] sm:$0xf]
        %v615 = vld [vmem:[%s3 + $0xc] sm:$0xf]
        %v616 = vld [vmem:[%s3 + $0x10] sm:$0xf]
        %v617 = vld [vmem:[%s3 + $0x14] sm:$0xf]
        %v618 = vld [vmem:[%s3 + $0x18] sm:$0xf]
        %v619 = vld [vmem:[%s3 + $0x1c] sm:$0xf]
        %v620 = vld [vmem:[%s4] sm:$0x1]
        %v622 = vlaneseq
        %v623 = vshrl.u32 %v622, 7
        %v624 = vsub.s32 0, %v623
        %v625 = vrot.slane %v620, %v624
        %v635 = vunpack.c.l.b16 %v612
        %v636 = vunpack.c.l.b16 %v613
        %v637 = vunpack.c.l.b16 %v614
        %v638 = vunpack.c.l.b16 %v615
        %v639 = vunpack.c.l.b16 %v616
        %v640 = vunpack.c.l.b16 %v617
        %v641 = vunpack.c.l.b16 %v618
        %v642 = vunpack.c.l.b16 %v619
        %v643 = vpack.c.b16 %v636, %v635
        %v644 = vpack.c.b16 %v638, %v637
        %v645 = vpack.c.b16 %v640, %v639
        %v646 = vpack.c.b16 %v642, %v641
        %vm651 = vcmask 523264
        %v653 = vsel %vm651, %v604, 0
        %v656 = vsel %vm651, %v605, 0
        %v659 = vsel %vm651, %v606, 0
        %v662 = vsel %vm651, %v607, 0
        %v665 = vsel %vm651, %v608, 0
        %v668 = vsel %vm651, %v609, 0
        %v671 = vsel %vm651, %v610, 0
        %v674 = vsel %vm651, %v611, 0
        %676 = vmatprep.subr.bf16.mxu0 0
        %677 = vmatpush1.bf16.msra.mxu0 0
        %678 = vmatprep.subr.bf16.mxu0 0
        %679 = vmatpush1.bf16.msra.mxu0 0
        %680 = vmatprep.subr.bf16.mxu0 0
        %681 = vmatpush1.bf16.msra.mxu0 0
        %682 = vmatprep.subr.bf16.mxu0 0
        %683 = vmatpush1.bf16.msra.mxu0 0
        %684 = vmatprep.subr.bf16.mxu0 0
        %685 = vmatpush1.bf16.msra.mxu0 %v646
        %686 = vmatprep.subr.bf16.mxu0 0
        %687 = vmatpush1.bf16.msra.mxu0 %v645
        %688 = vmatprep.subr.bf16.mxu0 0
        %689 = vmatpush1.bf16.msra.mxu0 %v644
        %690 = vmatprep.subr.bf16.mxu0 0
        %691 = vmatpush1.bf16.msra.mxu0 %v643
        %692 = vmatprep.subr.bf16.mxu0 0
        %693 = vmatpush2.bf16.msra.mxu0 0
        %694 = vmatprep.subr.bf16.mxu0 0
        %695 = vmatpush2.bf16.msra.mxu0 0
        %696 = vmatprep.subr.bf16.mxu0 0
        %697 = vmatpush2.bf16.msra.mxu0 0
        %698 = vmatprep.subr.bf16.mxu0 0
        %699 = vmatpush2.bf16.msra.mxu0 0
        %700 = vmatprep.subr.bf16.mxu0 0
        %701 = vmatpush2.bf16.msra.mxu0 0
        %702 = vmatprep.subr.bf16.mxu0 0
        %703 = vmatpush2.bf16.msra.mxu0 0
        %704 = vmatprep.subr.bf16.mxu0 0
        %705 = vmatpush2.bf16.msra.mxu0 0
        %706 = vmatprep.subr.bf16.mxu0 0
        %707 = vmatpush2.bf16.msra.mxu0 0
        %708 = vmatprep.mubr.bf16.mxu0 0
        %709 = vmatmul.mubr.bf16.gmra.mxu0 %v653
        %v710 = vpop.f32.mrf.mxu0
        %v711 = vadd.f32 %v625, %v710
        %v712 = vpop.f32.mrf.mxu0
        %v713 = vpop.f32.mrf.mxu0
        %v714 = vadd.f32 %v625, %v713
        %v715 = vpop.f32.mrf.mxu0
        %716 = vmatprep.mubr.bf16.mxu0 0
        %717 = vmatmul.mubr.bf16.gmra.mxu0 %v656
        %v718 = vpop.f32.mrf.mxu0
        %v719 = vadd.f32 %v625, %v718
        %v720 = vpop.f32.mrf.mxu0
        %v721 = vpop.f32.mrf.mxu0
        %v722 = vadd.f32 %v625, %v721
        %v723 = vpop.f32.mrf.mxu0
        %724 = vmatprep.mubr.bf16.mxu0 0
        %725 = vmatmul.mubr.bf16.gmra.mxu0 %v659
        %v726 = vpop.f32.mrf.mxu0
        %v727 = vadd.f32 %v625, %v726
        %v728 = vpop.f32.mrf.mxu0
        %v729 = vpop.f32.mrf.mxu0
        %v730 = vadd.f32 %v625, %v729
        %v731 = vpop.f32.mrf.mxu0
        %732 = vmatprep.mubr.bf16.mxu0 0
        %733 = vmatmul.mubr.bf16.gmra.mxu0 %v662
        %v734 = vpop.f32.mrf.mxu0
        %v735 = vadd.f32 %v625, %v734
        %v736 = vpop.f32.mrf.mxu0
        %v737 = vpop.f32.mrf.mxu0
        %v738 = vadd.f32 %v625, %v737
        %v739 = vpop.f32.mrf.mxu0
        %740 = vmatprep.mubr.bf16.mxu0 0
        %741 = vmatmul.mubr.bf16.gmra.mxu0 %v665
        %v742 = vpop.f32.mrf.mxu0
        %v743 = vadd.f32 %v625, %v742
        %v744 = vpop.f32.mrf.mxu0
        %v745 = vpop.f32.mrf.mxu0
        %v746 = vadd.f32 %v625, %v745
        %v747 = vpop.f32.mrf.mxu0
        %748 = vmatprep.mubr.bf16.mxu0 0
        %749 = vmatmul.mubr.bf16.gmra.mxu0 %v668
        %v750 = vpop.f32.mrf.mxu0
        %v751 = vadd.f32 %v625, %v750
        %v752 = vpop.f32.mrf.mxu0
        %v753 = vpop.f32.mrf.mxu0
        %v754 = vadd.f32 %v625, %v753
        %v755 = vpop.f32.mrf.mxu0
        %756 = vmatprep.mubr.bf16.mxu0 0
        %757 = vmatmul.mubr.bf16.gmra.mxu0 %v671
        %v758 = vpop.f32.mrf.mxu0
        %v759 = vadd.f32 %v625, %v758
        %v760 = vpop.f32.mrf.mxu0
        %v761 = vpop.f32.mrf.mxu0
        %v762 = vadd.f32 %v625, %v761
        %v763 = vpop.f32.mrf.mxu0
        %764 = vmatprep.mubr.bf16.mxu0 0
        %765 = vmatmul.mubr.bf16.gmra.mxu0 %v674
        %v766 = vpop.f32.mrf.mxu0
        %v767 = vadd.f32 %v625, %v766
        %v768 = vpop.f32.mrf.mxu0
        %v769 = vpop.f32.mrf.mxu0
        %v770 = vadd.f32 %v625, %v769
        %v771 = vpop.f32.mrf.mxu0
        %772 = vdwg.mxu0
        %v773 = vmax.f32 %v711, 0.0
        %v774 = vmax.f32 %v714, 0.0
        %v775 = vmax.f32 %v719, 0.0
        %v776 = vmax.f32 %v722, 0.0
        %v777 = vmax.f32 %v727, 0.0
        %v778 = vmax.f32 %v730, 0.0
        %v779 = vmax.f32 %v735, 0.0
        %v780 = vmax.f32 %v738, 0.0
        %v781 = vmax.f32 %v743, 0.0
        %v782 = vmax.f32 %v746, 0.0
        %v783 = vmax.f32 %v751, 0.0
        %v784 = vmax.f32 %v754, 0.0
        %v785 = vmax.f32 %v759, 0.0
        %v786 = vmax.f32 %v762, 0.0
        %v787 = vmax.f32 %v767, 0.0
        %v788 = vmax.f32 %v770, 0.0
        %v789 = vpack.c.bf16 %v774, %v773
        %v790 = vpack.c.bf16 %v776, %v775
        %v791 = vpack.c.bf16 %v778, %v777
        %v792 = vpack.c.bf16 %v780, %v779
        %v793 = vpack.c.bf16 %v782, %v781
        %v794 = vpack.c.bf16 %v784, %v783
        %v795 = vpack.c.bf16 %v786, %v785
        %v796 = vpack.c.bf16 %v788, %v787
        %v797 = vld [vmem:[%s5] sm:$0xf]
        %v798 = vld [vmem:[%s5 + $0x4] sm:$0xf]
        %v799 = vld [vmem:[%s5 + $0x8] sm:$0xf]
        %v800 = vld [vmem:[%s5 + $0xc] sm:$0xf]
        %v801 = vld [vmem:[%s5 + $0x10] sm:$0xf]
        %v802 = vld [vmem:[%s5 + $0x14] sm:$0xf]
        %v803 = vld [vmem:[%s5 + $0x18] sm:$0xf]
        %v804 = vld [vmem:[%s5 + $0x1c] sm:$0xf]
        %v805 = vld [vmem:[%s6] sm:$0x1]
        %v807 = vlaneseq
        %v808 = vshrl.u32 %v807, 7
        %v809 = vsub.s32 0, %v808
        %v810 = vrot.slane %v805, %v809
        %v820 = vunpack.c.l.b16 %v797
        %v821 = vunpack.c.l.b16 %v798
        %v822 = vunpack.c.l.b16 %v799
        %v823 = vunpack.c.l.b16 %v800
        %v824 = vunpack.c.l.b16 %v801
        %v825 = vunpack.c.l.b16 %v802
        %v826 = vunpack.c.l.b16 %v803
        %v827 = vunpack.c.l.b16 %v804
        %v828 = vpack.c.b16 %v821, %v820
        %v829 = vpack.c.b16 %v823, %v822
        %v830 = vpack.c.b16 %v825, %v824
        %v831 = vpack.c.b16 %v827, %v826
        %v837 = vsel %vm651, %v789, 0
        %v840 = vsel %vm651, %v790, 0
        %v843 = vsel %vm651, %v791, 0
        %v846 = vsel %vm651, %v792, 0
        %v849 = vsel %vm651, %v793, 0
        %v852 = vsel %vm651, %v794, 0
        %v855 = vsel %vm651, %v795, 0
        %v858 = vsel %vm651, %v796, 0
        %860 = vmatprep.subr.bf16.mxu0 0
        %861 = vmatpush1.bf16.msra.mxu0 0
        %862 = vmatprep.subr.bf16.mxu0 0
        %863 = vmatpush1.bf16.msra.mxu0 0
        %864 = vmatprep.subr.bf16.mxu0 0
        %865 = vmatpush1.bf16.msra.mxu0 0
        %866 = vmatprep.subr.bf16.mxu0 0
        %867 = vmatpush1.bf16.msra.mxu0 0
        %868 = vmatprep.subr.bf16.mxu0 0
        %869 = vmatpush1.bf16.msra.mxu0 %v831
        %870 = vmatprep.subr.bf16.mxu0 0
        %871 = vmatpush1.bf16.msra.mxu0 %v830
        %872 = vmatprep.subr.bf16.mxu0 0
        %873 = vmatpush1.bf16.msra.mxu0 %v829
        %874 = vmatprep.subr.bf16.mxu0 0
        %875 = vmatpush1.bf16.msra.mxu0 %v828
        %876 = vmatprep.subr.bf16.mxu0 0
        %877 = vmatpush2.bf16.msra.mxu0 0
        %878 = vmatprep.subr.bf16.mxu0 0
        %879 = vmatpush2.bf16.msra.mxu0 0
        %880 = vmatprep.subr.bf16.mxu0 0
        %881 = vmatpush2.bf16.msra.mxu0 0
        %882 = vmatprep.subr.bf16.mxu0 0
        %883 = vmatpush2.bf16.msra.mxu0 0
        %884 = vmatprep.subr.bf16.mxu0 0
        %885 = vmatpush2.bf16.msra.mxu0 0
        %886 = vmatprep.subr.bf16.mxu0 0
        %887 = vmatpush2.bf16.msra.mxu0 0
        %888 = vmatprep.subr.bf16.mxu0 0
        %889 = vmatpush2.bf16.msra.mxu0 0
        %890 = vmatprep.subr.bf16.mxu0 0
        %891 = vmatpush2.bf16.msra.mxu0 0
        %892 = vmatprep.mubr.bf16.mxu0 0
        %893 = vmatmul.mubr.bf16.gmra.mxu0 %v837
        %v894 = vpop.f32.mrf.mxu0
        %v895 = vadd.f32 %v810, %v894
        %v896 = vpop.f32.mrf.mxu0
        %v897 = vpop.f32.mrf.mxu0
        %v898 = vadd.f32 %v810, %v897
        %v899 = vpop.f32.mrf.mxu0
        %900 = vmatprep.mubr.bf16.mxu0 0
        %901 = vmatmul.mubr.bf16.gmra.mxu0 %v840
        %v902 = vpop.f32.mrf.mxu0
        %v903 = vadd.f32 %v810, %v902
        %v904 = vpop.f32.mrf.mxu0
        %v905 = vpop.f32.mrf.mxu0
        %v906 = vadd.f32 %v810, %v905
        %v907 = vpop.f32.mrf.mxu0
        %908 = vmatprep.mubr.bf16.mxu0 0
        %909 = vmatmul.mubr.bf16.gmra.mxu0 %v843
        %v910 = vpop.f32.mrf.mxu0
        %v911 = vadd.f32 %v810, %v910
        %v912 = vpop.f32.mrf.mxu0
        %v913 = vpop.f32.mrf.mxu0
        %v914 = vadd.f32 %v810, %v913
        %v915 = vpop.f32.mrf.mxu0
        %916 = vmatprep.mubr.bf16.mxu0 0
        %917 = vmatmul.mubr.bf16.gmra.mxu0 %v846
        %v918 = vpop.f32.mrf.mxu0
        %v919 = vadd.f32 %v810, %v918
        %v920 = vpop.f32.mrf.mxu0
        %v921 = vpop.f32.mrf.mxu0
        %v922 = vadd.f32 %v810, %v921
        %v923 = vpop.f32.mrf.mxu0
        %924 = vmatprep.mubr.bf16.mxu0 0
        %925 = vmatmul.mubr.bf16.gmra.mxu0 %v849
        %v926 = vpop.f32.mrf.mxu0
        %v927 = vadd.f32 %v810, %v926
        %v928 = vpop.f32.mrf.mxu0
        %v929 = vpop.f32.mrf.mxu0
        %v930 = vadd.f32 %v810, %v929
        %v931 = vpop.f32.mrf.mxu0
        %932 = vmatprep.mubr.bf16.mxu0 0
        %933 = vmatmul.mubr.bf16.gmra.mxu0 %v852
        %v934 = vpop.f32.mrf.mxu0
        %v935 = vadd.f32 %v810, %v934
        %v936 = vpop.f32.mrf.mxu0
        %v937 = vpop.f32.mrf.mxu0
        %v938 = vadd.f32 %v810, %v937
        %v939 = vpop.f32.mrf.mxu0
        %940 = vmatprep.mubr.bf16.mxu0 0
        %941 = vmatmul.mubr.bf16.gmra.mxu0 %v855
        %v942 = vpop.f32.mrf.mxu0
        %v943 = vadd.f32 %v810, %v942
        %v944 = vpop.f32.mrf.mxu0
        %v945 = vpop.f32.mrf.mxu0
        %v946 = vadd.f32 %v810, %v945
        %v947 = vpop.f32.mrf.mxu0
        %948 = vmatprep.mubr.bf16.mxu0 0
        %949 = vmatmul.mubr.bf16.gmra.mxu0 %v858
        %v950 = vpop.f32.mrf.mxu0
        %v951 = vadd.f32 %v810, %v950
        %v952 = vpop.f32.mrf.mxu0
        %v953 = vpop.f32.mrf.mxu0
        %v954 = vadd.f32 %v810, %v953
        %v955 = vpop.f32.mrf.mxu0
        %956 = vdwg.mxu0
        %v957 = vmax.f32 %v895, 0.0
        %v958 = vmax.f32 %v898, 0.0
        %v959 = vmax.f32 %v903, 0.0
        %v960 = vmax.f32 %v906, 0.0
        %v961 = vmax.f32 %v911, 0.0
        %v962 = vmax.f32 %v914, 0.0
        %v963 = vmax.f32 %v919, 0.0
        %v964 = vmax.f32 %v922, 0.0
        %v965 = vmax.f32 %v927, 0.0
        %v966 = vmax.f32 %v930, 0.0
        %v967 = vmax.f32 %v935, 0.0
        %v968 = vmax.f32 %v938, 0.0
        %v969 = vmax.f32 %v943, 0.0
        %v970 = vmax.f32 %v946, 0.0
        %v971 = vmax.f32 %v951, 0.0
        %v972 = vmax.f32 %v954, 0.0
        %v973 = vld [vmem:[%s7] sm:$0x1]
        %v975 = vlaneseq
        %v976 = vshrl.u32 %v975, 7
        %v977 = vsub.s32 0, %v976
        %v978 = vrot.slane %v973, %v977
        %v980 = vmul.f32 %v957, %v978
        %v981 = vmul.f32 %v958, %v978
        %v982 = vmul.f32 %v959, %v978
        %v983 = vmul.f32 %v960, %v978
        %v984 = vmul.f32 %v961, %v978
        %v985 = vmul.f32 %v962, %v978
        %v986 = vmul.f32 %v963, %v978
        %v987 = vmul.f32 %v964, %v978
        %v988 = vmul.f32 %v965, %v978
        %v989 = vmul.f32 %v966, %v978
        %v990 = vmul.f32 %v967, %v978
        %v991 = vmul.f32 %v968, %v978
        %v992 = vmul.f32 %v969, %v978
        %v993 = vmul.f32 %v970, %v978
        %v994 = vmul.f32 %v971, %v978
        %v995 = vmul.f32 %v972, %v978
        %v996 = vsel %vm651, %v980, 0.0
        %997 = vadd.xlane.f32.xlu0 %v996
        %v998 = vpop.xlane.xlu0 %997
        %v999 = vsel %vm651, %v981, 0.0
        %1000 = vadd.xlane.f32.xlu0 %v999
        %v1001 = vpop.xlane.xlu0 %1000
        %v1002 = vsel %vm651, %v982, 0.0
        %1003 = vadd.xlane.f32.xlu0 %v1002
        %v1004 = vpop.xlane.xlu0 %1003
        %v1005 = vsel %vm651, %v983, 0.0
        %1006 = vadd.xlane.f32.xlu0 %v1005
        %v1007 = vpop.xlane.xlu0 %1006
        %v1008 = vsel %vm651, %v984, 0.0
        %1009 = vadd.xlane.f32.xlu0 %v1008
        %v1010 = vpop.xlane.xlu0 %1009
        %v1011 = vsel %vm651, %v985, 0.0
        %1012 = vadd.xlane.f32.xlu0 %v1011
        %v1013 = vpop.xlane.xlu0 %1012
        %v1014 = vsel %vm651, %v986, 0.0
        %1015 = vadd.xlane.f32.xlu0 %v1014
        %v1016 = vpop.xlane.xlu0 %1015
        %v1017 = vsel %vm651, %v987, 0.0
        %1018 = vadd.xlane.f32.xlu0 %v1017
        %v1019 = vpop.xlane.xlu0 %1018
        %v1020 = vsel %vm651, %v988, 0.0
        %1021 = vadd.xlane.f32.xlu0 %v1020
        %v1022 = vpop.xlane.xlu0 %1021
        %v1023 = vsel %vm651, %v989, 0.0
        %1024 = vadd.xlane.f32.xlu0 %v1023
        %v1025 = vpop.xlane.xlu0 %1024
        %v1026 = vsel %vm651, %v990, 0.0
        %1027 = vadd.xlane.f32.xlu0 %v1026
        %v1028 = vpop.xlane.xlu0 %1027
        %v1029 = vsel %vm651, %v991, 0.0
        %1030 = vadd.xlane.f32.xlu0 %v1029
        %v1031 = vpop.xlane.xlu0 %1030
        %v1032 = vsel %vm651, %v992, 0.0
        %1033 = vadd.xlane.f32.xlu0 %v1032
        %v1034 = vpop.xlane.xlu0 %1033
        %v1035 = vsel %vm651, %v993, 0.0
        %1036 = vadd.xlane.f32.xlu0 %v1035
        %v1037 = vpop.xlane.xlu0 %1036
        %v1038 = vsel %vm651, %v994, 0.0
        %1039 = vadd.xlane.f32.xlu0 %v1038
        %v1040 = vpop.xlane.xlu0 %1039
        %v1041 = vsel %vm651, %v995, 0.0
        %1042 = vadd.xlane.f32.xlu0 %v1041
        %v1043 = vpop.xlane.xlu0 %1042
        %v1044 = vld [vmem:[#allocation2] sm:$0x1]
        %v1046 = vlaneseq
        %v1047 = vshrl.u32 %v1046, 7
        %v1048 = vsub.s32 0, %v1047
        %v1049 = vrot.slane %v1044, %v1048
        %v1051 = vadd.f32 %v998, %v1049
        %v1052 = vadd.f32 %v1001, %v1049
        %v1053 = vadd.f32 %v1004, %v1049
        %v1054 = vadd.f32 %v1007, %v1049
        %v1055 = vadd.f32 %v1010, %v1049
        %v1056 = vadd.f32 %v1013, %v1049
        %v1057 = vadd.f32 %v1016, %v1049
        %v1058 = vadd.f32 %v1019, %v1049
        %v1059 = vadd.f32 %v1022, %v1049
        %v1060 = vadd.f32 %v1025, %v1049
        %v1061 = vadd.f32 %v1028, %v1049
        %v1062 = vadd.f32 %v1031, %v1049
        %v1063 = vadd.f32 %v1034, %v1049
        %v1064 = vadd.f32 %v1037, %v1049
        %v1065 = vadd.f32 %v1040, %v1049
        %v1066 = vadd.f32 %v1043, %v1049
        %v1067 = vxor.u32 %v1051, 2147483648
        %v1068 = vxor.u32 %v1052, 2147483648
        %v1069 = vxor.u32 %v1053, 2147483648
        %v1070 = vxor.u32 %v1054, 2147483648
        %v1071 = vxor.u32 %v1055, 2147483648
        %v1072 = vxor.u32 %v1056, 2147483648
        %v1073 = vxor.u32 %v1057, 2147483648
        %v1074 = vxor.u32 %v1058, 2147483648
        %v1075 = vxor.u32 %v1059, 2147483648
        %v1076 = vxor.u32 %v1060, 2147483648
        %v1077 = vxor.u32 %v1061, 2147483648
        %v1078 = vxor.u32 %v1062, 2147483648
        %v1079 = vxor.u32 %v1063, 2147483648
        %v1080 = vxor.u32 %v1064, 2147483648
        %v1081 = vxor.u32 %v1065, 2147483648
        %v1082 = vxor.u32 %v1066, 2147483648
        %v1083 = vmul.f32 %v1067, 1.442695
        %v1084 = vpow.pop %v1083
        %v1085 = vmul.f32 %v1068, 1.442695
        %v1086 = vpow.pop %v1085
        %v1087 = vmul.f32 %v1069, 1.442695
        %v1088 = vpow.pop %v1087
        %v1089 = vmul.f32 %v1070, 1.442695
        %v1090 = vpow.pop %v1089
        %v1091 = vmul.f32 %v1071, 1.442695
        %v1092 = vpow.pop %v1091
        %v1093 = vmul.f32 %v1072, 1.442695
        %v1094 = vpow.pop %v1093
        %v1095 = vmul.f32 %v1073, 1.442695
        %v1096 = vpow.pop %v1095
        %v1097 = vmul.f32 %v1074, 1.442695
        %v1098 = vpow.pop %v1097
        %v1099 = vmul.f32 %v1075, 1.442695
        %v1100 = vpow.pop %v1099
        %v1101 = vmul.f32 %v1076, 1.442695
        %v1102 = vpow.pop %v1101
        %v1103 = vmul.f32 %v1077, 1.442695
        %v1104 = vpow.pop %v1103
        %v1105 = vmul.f32 %v1078, 1.442695
        %v1106 = vpow.pop %v1105
        %v1107 = vmul.f32 %v1079, 1.442695
        %v1108 = vpow.pop %v1107
        %v1109 = vmul.f32 %v1080, 1.442695
        %v1110 = vpow.pop %v1109
        %v1111 = vmul.f32 %v1081, 1.442695
        %v1112 = vpow.pop %v1111
        %v1113 = vmul.f32 %v1082, 1.442695
        %v1114 = vpow.pop %v1113
        %v1115 = vadd.f32 %v1084, 1.0
        %v1116 = vadd.f32 %v1086, 1.0
        %v1117 = vadd.f32 %v1088, 1.0
        %v1118 = vadd.f32 %v1090, 1.0
        %v1119 = vadd.f32 %v1092, 1.0
        %v1120 = vadd.f32 %v1094, 1.0
        %v1121 = vadd.f32 %v1096, 1.0
        %v1122 = vadd.f32 %v1098, 1.0
        %v1123 = vadd.f32 %v1100, 1.0
        %v1124 = vadd.f32 %v1102, 1.0
        %v1125 = vadd.f32 %v1104, 1.0
        %v1126 = vadd.f32 %v1106, 1.0
        %v1127 = vadd.f32 %v1108, 1.0
        %v1128 = vadd.f32 %v1110, 1.0
        %v1129 = vadd.f32 %v1112, 1.0
        %v1130 = vadd.f32 %v1114, 1.0
        %v1131 = vrcp.pop %v1115
        %v1132 = vmul.f32 1.0, %v1131
        %v1133 = vrcp.pop %v1116
        %v1134 = vmul.f32 1.0, %v1133
        %v1135 = vrcp.pop %v1117
        %v1136 = vmul.f32 1.0, %v1135
        %v1137 = vrcp.pop %v1118
        %v1138 = vmul.f32 1.0, %v1137
        %v1139 = vrcp.pop %v1119
        %v1140 = vmul.f32 1.0, %v1139
        %v1141 = vrcp.pop %v1120
        %v1142 = vmul.f32 1.0, %v1141
        %v1143 = vrcp.pop %v1121
        %v1144 = vmul.f32 1.0, %v1143
        %v1145 = vrcp.pop %v1122
        %v1146 = vmul.f32 1.0, %v1145
        %v1147 = vrcp.pop %v1123
        %v1148 = vmul.f32 1.0, %v1147
        %v1149 = vrcp.pop %v1124
        %v1150 = vmul.f32 1.0, %v1149
        %v1151 = vrcp.pop %v1125
        %v1152 = vmul.f32 1.0, %v1151
        %v1153 = vrcp.pop %v1126
        %v1154 = vmul.f32 1.0, %v1153
        %v1155 = vrcp.pop %v1127
        %v1156 = vmul.f32 1.0, %v1155
        %v1157 = vrcp.pop %v1128
        %v1158 = vmul.f32 1.0, %v1157
        %v1159 = vrcp.pop %v1129
        %v1160 = vmul.f32 1.0, %v1159
        %v1161 = vrcp.pop %v1130
        %v1162 = vmul.f32 1.0, %v1161
        %1164 = vset.pattern.permute.xlu0 0
        %1165 = vperm.xlu0 %1164, %v1132
        %v1166 = vpop.permute.xlu0 %1165
        %1169 = vset.pattern.permute.xlu0 0
        %1170 = vperm.xlu0 %1169, %v1134
        %v1171 = vpop.permute.xlu0 %1170
        %1174 = vset.pattern.permute.xlu0 0
        %1175 = vperm.xlu0 %1174, %v1136
        %v1176 = vpop.permute.xlu0 %1175
        %1179 = vset.pattern.permute.xlu0 0
        %1180 = vperm.xlu0 %1179, %v1138
        %v1181 = vpop.permute.xlu0 %1180
        %1184 = vset.pattern.permute.xlu0 0
        %1185 = vperm.xlu0 %1184, %v1140
        %v1186 = vpop.permute.xlu0 %1185
        %1189 = vset.pattern.permute.xlu0 0
        %1190 = vperm.xlu0 %1189, %v1142
        %v1191 = vpop.permute.xlu0 %1190
        %1194 = vset.pattern.permute.xlu0 0
        %1195 = vperm.xlu0 %1194, %v1144
        %v1196 = vpop.permute.xlu0 %1195
        %1199 = vset.pattern.permute.xlu0 0
        %1200 = vperm.xlu0 %1199, %v1146
        %v1201 = vpop.permute.xlu0 %1200
        %1204 = vset.pattern.permute.xlu0 0
        %1205 = vperm.xlu0 %1204, %v1148
        %v1206 = vpop.permute.xlu0 %1205
        %1209 = vset.pattern.permute.xlu0 0
        %1210 = vperm.xlu0 %1209, %v1150
        %v1211 = vpop.permute.xlu0 %1210
        %1214 = vset.pattern.permute.xlu0 0
        %1215 = vperm.xlu0 %1214, %v1152
        %v1216 = vpop.permute.xlu0 %1215
        %1219 = vset.pattern.permute.xlu0 0
        %1220 = vperm.xlu0 %1219, %v1154
        %v1221 = vpop.permute.xlu0 %1220
        %1224 = vset.pattern.permute.xlu0 0
        %1225 = vperm.xlu0 %1224, %v1156
        %v1226 = vpop.permute.xlu0 %1225
        %1229 = vset.pattern.permute.xlu0 0
        %1230 = vperm.xlu0 %1229, %v1158
        %v1231 = vpop.permute.xlu0 %1230
        %1234 = vset.pattern.permute.xlu0 0
        %1235 = vperm.xlu0 %1234, %v1160
        %v1236 = vpop.permute.xlu0 %1235
        %1239 = vset.pattern.permute.xlu0 0
        %1240 = vperm.xlu0 %1239, %v1162
        %v1241 = vpop.permute.xlu0 %1240
        %1243 = vst [vmem:[%s352] sm:$0xff] %v1166
        %1244 = vst [vmem:[%s352 + $0x8] sm:$0xff] %v1171
        %1245 = vst [vmem:[%s352 + $0x10] sm:$0xff] %v1176
        %1246 = vst [vmem:[%s352 + $0x18] sm:$0xff] %v1181
        %1247 = vst [vmem:[%s352 + $0x20] sm:$0xff] %v1186
        %1248 = vst [vmem:[%s352 + $0x28] sm:$0xff] %v1191
        %1249 = vst [vmem:[%s352 + $0x30] sm:$0xff] %v1196
        %1250 = vst [vmem:[%s352 + $0x38] sm:$0xff] %v1201
        %1251 = vst [vmem:[%s352 + $0x40] sm:$0xff] %v1206
        %1252 = vst [vmem:[%s352 + $0x48] sm:$0xff] %v1211
        %1253 = vst [vmem:[%s352 + $0x50] sm:$0xff] %v1216
        %1254 = vst [vmem:[%s352 + $0x58] sm:$0xff] %v1221
        %1255 = vst [vmem:[%s352 + $0x60] sm:$0xff] %v1226
        %1256 = vst [vmem:[%s352 + $0x68] sm:$0xff] %v1231
        %1257 = vst [vmem:[%s352 + $0x70] sm:$0xff] %v1236
        %1258 = vst [vmem:[%s352 + $0x78] sm:$0xff] %v1241
        %s1259 = sand.u32 %s230, 1
        %s1260 = scalar_lea.sflag [#allocation5], %s1259
        %s1261 = sand.u32 %s230, 1
        %s1262 = smul.addr %s1261, 128
        %s1263 = scalar_lea.vmem [#allocation6], %s1262
        // Predicated region
        $region61: #{tpu_custom_call.1} parent=55 // pred_check
          %p1264 = pneg %p240
        $region62: #{tpu_custom_call.1} parent=55 // pred_check_branch
          %1266 = sbr.rel (%p1264) target = $region64
        $region63: #{tpu_custom_call.1} parent=55 // pred_region
          %s1267 = smul.u32 16, %s28
          %s1269 = ssub.s32 2048, 2048
          %1270 = vsyncadd %s1260, %s1269
          %s1271 = smul.addr %s1267, 128
          %s1272 = scalar_lea.hbm %s9, %s1271
          %s1273 = sshll.u32 %s1263, 4
          %s1274 = int_to_ptr.vmem [resolvable:$true] %s1273
          %1279 = dma.vmem_to_hbm [thread:$0]  %s1274, 2048, %s1272, %s1260, 128, 128, 8
        $region64: #{tpu_custom_call.1} parent=55 // pred_fallthru
          _
      $region56: #{tpu_custom_call.1} parent=5 // pred_fallthru
        _
      %p1280 = scmp.le.s32.totalorder 2, %s23
      // Predicated region
      $region65: #{tpu_custom_call.1} parent=5 // pred_check
        %p1281 = pneg %p1280
      $region66: #{tpu_custom_call.1} parent=5 // pred_check_branch
        %1283 = sbr.rel (%p1281) target = $region68
      $region67: #{tpu_custom_call.1} parent=5 // pred_region
        %s1284 = ssub.s32 %s23, 2
        // Predicated region
        $region69: #{tpu_custom_call.1} parent=67 // pred_check
          %p1285 = pneg %p246
        $region70: #{tpu_custom_call.1} parent=67 // pred_check_branch
          %1287 = sbr.rel (%p1285) target = $region72
        $region71: #{tpu_custom_call.1} parent=67 // pred_region
          %s1288 = sand.u32 %s231, 1
          %s1289 = scalar_lea.sflag [#allocation5], %s1288
          %s1290 = sand.u32 %s231, 1
          %s1291 = smul.addr %s1290, 128
          %s1292 = scalar_lea.vmem [#allocation6], %s1291
          %1293 = dma.done %s1289, 2048
        $region72: #{tpu_custom_call.1} parent=67 // pred_fallthru
          _
      $region68: #{tpu_custom_call.1} parent=5 // pred_fallthru
        _
    $region6: #{tpu_custom_call.1} parent=1 // loop_footer
      %s27 = sadd.s32 1, %s23
    $region7: #{tpu_custom_call.1} parent=1 // loop_footer_branch
      %22 = sbr.rel target = $region3
    $region8: #{tpu_custom_call.1} parent=1 // loop_exit
      _
    %1294 = vsyncpa [#allocation4], 1
    %s1295 = scalar_lea.sflag [#allocation4], 1
    %1296 = vsyncpa %s1295, 1
    %1297 = vsyncpa [#allocation5], 1
    %s1298 = scalar_lea.sflag [#allocation5], 1
    %1299 = vsyncpa %s1298, 1

</llo_original>
